<compile_context>
chip_gen: v5e
topology: v5e:2x2
jax: 0.10.0
libtpu: 0.0.40
codegen_flags: <defaults>
</compile_context>

<pallas_src>
import functools
import math

import jax
import jax.numpy as jnp
from jax.experimental import pallas as pl
from jax.experimental.pallas import tpu as pltpu


def _round_up(n, m):
    return (n + m - 1) // m * m


def _sublane_granule(dtype):
    itemsize = jnp.dtype(dtype).itemsize
    if itemsize >= 4:
        return 8
    if itemsize == 2:
        return 16
    return 32


def _const_block_spec(shape):
    """Grid-invariant block; single-buffer it when the API allows (saves VMEM)."""
    index_map = lambda i: (0,) * len(shape)
    try:
        return pl.BlockSpec(shape, index_map, pipeline_mode=pl.Buffered(1)), 1
    except Exception:  # fall back to default double-buffering on older APIs
        return pl.BlockSpec(shape, index_map), 2


def _tpu_vmem_info():
    """Return (vmem_budget, vmem_limit_cap, assume_two_tensorcores) per generation."""
    try:
        cap = int(pltpu.get_tpu_info().vmem_capacity_bytes)
    except Exception:
        cap = 64 << 20  # conservative default that is valid on every generation
    if cap >= (128 << 20):          # v5e / v6e: 128 MiB VMEM per TensorCore
        return 96 << 20, 100 << 20, False
    # v7x-class: 64 MiB VMEM per TensorCore, 2 TensorCores per chip
    return 40 << 20, 56 << 20, True


def _nap_kernel(x_ref, w_ref, b_ref, o_ref, *, cast_to_bf16):
    """Fused Linear + LogSoftmax for one (tm, A_pad) output tile."""
    a = x_ref[...]
    w = w_ref[...]
    if cast_to_bf16:  # optional MXU speedup for f32 inputs (numerics tradeoff)
        a = a.astype(jnp.bfloat16)
        w = w.astype(jnp.bfloat16)
    logits = jnp.dot(a, w, preferred_element_type=jnp.float32)
    logits = logits + b_ref[...]              # f32 bias; padded lanes carry -1e30

    # Numerically stable log-softmax over the lane-dense last dim, in f32.
    m = jnp.max(logits, axis=-1, keepdims=True)
    shifted = logits - m
    lse = jnp.log(jnp.sum(jnp.exp(shifted), axis=-1, keepdims=True))
    o_ref[...] = (shifted - lse).astype(o_ref.dtype)


def pack_nap_params(weight, bias):
    """Pack nn.Linear params once (hoist this out of step loops): weight is stored
    transposed [hidden, A_pad] with the action axis padded to a multiple of 128;
    padded bias lanes carry -1e30 so padded logits never affect the log-softmax."""
    actionspace, hidden = weight.shape
    a_pad = _round_up(actionspace, 128)
    w_t = jnp.zeros((hidden, a_pad), weight.dtype).at[:, :actionspace].set(weight.T)
    b_pad = (
        jnp.full((1, a_pad), -1e30, jnp.float32)
        .at[0, :actionspace]
        .set(bias.astype(jnp.float32))
    )
    return w_t, b_pad, actionspace


def next_action_prediction_packed(
    x, w_t, b_pad, actionspace, *, tm=512, vmem_budget_bytes=None, use_bf16_matmul=False
):
    """x: [batch, seq, hidden]; w_t: [hidden, A_pad]; b_pad: [1, A_pad] (f32)."""
    batch, seq, hidden = x.shape
    hidden_w, a_pad = w_t.shape
    assert hidden_w == hidden, "packed weight must be [hidden, A_pad]"
    out_dtype = x.dtype

    M = batch * seq
    x2d = x.reshape(M, hidden)              # pure metadata reshape, no HBM copy

    granule = _sublane_granule(x.dtype)     # 8 f32 / 16 bf16 / 32 int8-fp8
    budget_default, limit_cap, two_tc = _tpu_vmem_info()
    budget = budget_default if vmem_budget_bytes is None else int(vmem_budget_bytes)
    budget = min(budget, limit_cap)
    reserve = 6 << 20                       # Mosaic internal scratch + slack

    x_it = jnp.dtype(x.dtype).itemsize
    o_it = jnp.dtype(out_dtype).itemsize

    w_spec, w_bufs = _const_block_spec((hidden, a_pad))
    b_spec, b_bufs = _const_block_spec((1, a_pad))

    fixed_bytes = (
        w_bufs * hidden * a_pad * jnp.dtype(w_t.dtype).itemsize + b_bufs * a_pad * 4
    )
    # Per-row VMEM: double-buffered x and out tiles + ~2 f32 epilogue temporaries.
    per_row_bytes = 2 * hidden * x_it + 2 * a_pad * o_it + 2 * a_pad * 4

    # Directly solve for the largest tm that fits the budget (no halving loop).
    avail = max(budget - reserve - fixed_bytes, per_row_bytes * granule)
    tm_fit = avail // per_row_bytes
    tm = min(int(tm), int(tm_fit))

    if two_tc and M >= 512:
        # v7x: keep >=2 grid steps so the "parallel" row axis can use both TCs.
        tm = min(tm, _round_up(pl.cdiv(M, 2), 256))

    row_cap = _round_up(M, granule)
    if tm >= row_cap:
        tm = row_cap                        # single grid step covers all rows
    elif tm >= 256:
        tm = (tm // 256) * 256              # full-height MXU passes
    else:
        tm = max(granule, (tm // granule) * granule)
    # TODO(synk): tile A_pad (online logsumexp accumulator) and/or hidden (f32 K
    #             accumulator) when the weight block alone exhausts the VMEM budget.

    footprint = fixed_bytes + tm * per_row_bytes
    vmem_limit = int(min(max(int(footprint * 1.25) + reserve, 32 << 20), limit_cap))

    kernel = functools.partial(
        _nap_kernel,
        cast_to_bf16=bool(use_bf16_matmul) and jnp.dtype(x.dtype) == jnp.dtype(jnp.float32),
    )

    out = pl.pallas_call(
        kernel,
        out_shape=jax.ShapeDtypeStruct((M, a_pad), out_dtype),
        grid_spec=pltpu.PrefetchScalarGridSpec(
            num_scalar_prefetch=0,
            grid=(pl.cdiv(M, tm),),         # ragged last block is masked by Pallas
            in_specs=[
                pl.BlockSpec((tm, hidden), lambda i: (i, 0)),
                w_spec,                      # grid-invariant, VMEM-resident
                b_spec,                      # grid-invariant, VMEM-resident
            ],
            out_specs=pl.BlockSpec((tm, a_pad), lambda i: (i, 0)),
        ),
        compiler_params=pltpu.CompilerParams(
            dimension_semantics=("parallel",),
            vmem_limit_bytes=vmem_limit,
        ),
    )(x2d, w_t, b_pad)

    if a_pad != actionspace:                # only when actionspace % 128 != 0
        out = out[:, :actionspace]
    return out.reshape(batch, seq, actionspace)


def next_action_prediction(x, weight, bias, **kwargs):
    """Convenience wrapper (packs params on every call).  For step loops, call
    pack_nap_params once and reuse next_action_prediction_packed."""
    w_t, b_pad, actionspace = pack_nap_params(weight, bias)
    return next_action_prediction_packed(x, w_t, b_pad, actionspace, **kwargs)


if __name__ == "__main__":
    key = jax.random.PRNGKey(0)

    def make_case(k, batch, seq, hidden, actionspace, dtype):
        kx, kw, kb = jax.random.split(k, 3)
        bound = 1.0 / math.sqrt(hidden)  # nn.Linear-style U(-1/sqrt(h), 1/sqrt(h))
        weight = jax.random.uniform(kw, (actionspace, hidden), jnp.float32, -bound, bound)
        bias = jax.random.uniform(kb, (actionspace,), jnp.float32, -bound, bound)
        x = jax.random.normal(kx, (batch, seq, hidden), jnp.float32)
        return x.astype(dtype), weight.astype(dtype), bias

    def reference(x, w, b):
        return jax.nn.log_softmax(
            x.astype(jnp.float32) @ w.T.astype(jnp.float32) + b, axis=-1
        )

    k1, k2, k3, k4 = jax.random.split(key, 4)

    # Case 1: shapes implied by the module (f32); packed params reused across calls.
    x, w, b = make_case(k1, 2, 8, 32, 16, jnp.float32)
    w_t, b_pad, aspace = pack_nap_params(w, b)   # hoisted out of the "step loop"
    out = jax.block_until_ready(next_action_prediction_packed(x, w_t, b_pad, aspace))
    assert out.shape == (2, 8, 16)
    assert jnp.allclose(out, reference(x, w, b), atol=1e-5, rtol=1e-5), "f32 mismatch"
    out2 = jax.block_until_ready(next_action_prediction_packed(x, w_t, b_pad, aspace))
    assert jnp.allclose(out2, out), "packed-param reuse mismatch"

    # Case 2: ragged row count (M=15, masked tail rows) + actionspace % 128 != 0.
    x, w, b = make_case(k2, 3, 5, 32, 10, jnp.float32)
    out = jax.block_until_ready(next_action_prediction(x, w, b))
    assert out.shape == (3, 5, 10)
    assert jnp.allclose(out, reference(x, w, b), atol=1e-5, rtol=1e-5), "ragged mismatch"

    # Case 3: bf16 operands fed straight to the MXU (f32 accumulate + f32 epilogue).
    x, w, b = make_case(k3, 2, 8, 32, 16, jnp.bfloat16)
    out = jax.block_until_ready(next_action_prediction(x, w, b))
    assert out.shape == (2, 8, 16)
    assert jnp.allclose(out.astype(jnp.float32), reference(x, w, b), atol=5e-2, rtol=5e-2)

    # Case 4: multi-step grid with a masked last block (tm=128, M=510), plus the
    # optional bf16-matmul flag for f32 inputs.
    x, w, b = make_case(k4, 3, 170, 64, 20, jnp.float32)
    out = jax.block_until_ready(next_action_prediction(x, w, b, tm=128))
    assert out.shape == (3, 170, 20)
    assert jnp.allclose(out, reference(x, w, b), atol=1e-4, rtol=1e-4), "multi-step mismatch"
    out_bf = jax.block_until_ready(
        next_action_prediction(x, w, b, tm=128, use_bf16_matmul=True)
    )
    assert jnp.allclose(out_bf, reference(x, w, b), atol=5e-2, rtol=5e-2), "bf16-mm mismatch"

    print("KERNEL_OK")
</pallas_src>

<mosaic_0001>
module attributes {stable_mosaic.version = 11 : i64} {
  func.func @_nap_kernel(%arg0: i32, %arg1: memref<16x32xf32, #tpu.memory_space<vmem>>, %arg2: memref<32x128xf32, #tpu.memory_space<vmem>>, %arg3: memref<1x128xf32, #tpu.memory_space<vmem>>, %arg4: memref<16x128xf32, #tpu.memory_space<vmem>>) attributes {dimension_semantics = [#tpu.dimension_semantics<parallel>], iteration_bounds = array<i64: 1>, scalar_prefetch = 0 : i64, scratch_operands = 0 : i64, tpu.core_type = #tpu.core_type<tc>, window_params = [{transform_indices = @transform_0, window_bounds = array<i64: 16, 32>}, {pipeline_mode = #tpu.pipeline_mode<synchronous>, transform_indices = @transform_1, window_bounds = array<i64: 32, 128>}, {pipeline_mode = #tpu.pipeline_mode<synchronous>, transform_indices = @transform_2, window_bounds = array<i64: 1, 128>}, {transform_indices = @transform_3, window_bounds = array<i64: 16, 128>}]} {
    %c0 = arith.constant 0 : index
    %c0_0 = arith.constant 0 : index
    %0 = vector.load %arg1[%c0, %c0_0] : memref<16x32xf32, #tpu.memory_space<vmem>>, vector<16x32xf32>
    %c0_1 = arith.constant 0 : index
    %c0_2 = arith.constant 0 : index
    %1 = vector.load %arg2[%c0_1, %c0_2] : memref<32x128xf32, #tpu.memory_space<vmem>>, vector<32x128xf32>
    %cst = arith.constant dense<0.000000e+00> : vector<16x128xf32>
    %2 = tpu.matmul %0, %1, %cst {dimension_numbers = #tpu.dot_dimension_numbers<[1], [0], [0], [1], [0, 0, 1, 1], [], []>} : vector<16x32xf32>, vector<32x128xf32>, vector<16x128xf32> -> vector<16x128xf32>
    %c0_3 = arith.constant 0 : index
    %c0_4 = arith.constant 0 : index
    %3 = vector.load %arg3[%c0_3, %c0_4] : memref<1x128xf32, #tpu.memory_space<vmem>>, vector<1x128xf32>
    %4 = vector.broadcast %3 : vector<1x128xf32> to vector<16x128xf32>
    %5 = arith.addf %2, %4 : vector<16x128xf32>
    %cst_5 = arith.constant dense<0xFF800000> : vector<16xf32>
    %6 = vector.multi_reduction <maximumf>, %5, %cst_5 [1] : vector<16x128xf32> to vector<16xf32>
    %7 = vector.shape_cast %6 : vector<16xf32> to vector<16x1xf32>
    %8 = vector.broadcast %7 : vector<16x1xf32> to vector<16x128xf32>
    %9 = arith.subf %5, %8 : vector<16x128xf32>
    %10 = math.exp %9 : vector<16x128xf32>
    %cst_6 = arith.constant dense<0.000000e+00> : vector<16xf32>
    %11 = vector.multi_reduction <add>, %10, %cst_6 [1] : vector<16x128xf32> to vector<16xf32>
    %12 = vector.shape_cast %11 : vector<16xf32> to vector<16x1xf32>
    %13 = math.log %12 : vector<16x1xf32>
    %14 = vector.broadcast %13 : vector<16x1xf32> to vector<16x128xf32>
    %15 = arith.subf %9, %14 : vector<16x128xf32>
    %c0_7 = arith.constant 0 : index
    %c0_8 = arith.constant 0 : index
    %16 = vector.load %arg4[%c0_7, %c0_8] : memref<16x128xf32, #tpu.memory_space<vmem>>, vector<16x128xf32>
    tpu.vector_store %arg4[%c0_7, %c0_8], %15 {strides = array<i32>} : memref<16x128xf32, #tpu.memory_space<vmem>>, vector<16x128xf32>,
    return
  }
  func.func @transform_0(%arg0: i32) -> (i32, i32) {
    %c0_i32 = arith.constant 0 : i32
    %c0_i32_0 = arith.constant 0 : i32
    return %arg0, %c0_i32 : i32, i32
  }
  func.func @transform_1(%arg0: i32) -> (i32, i32) {
    %c0_i32 = arith.constant 0 : i32
    %c0_i32_0 = arith.constant 0 : i32
    %c0_i32_1 = arith.constant 0 : i32
    return %c0_i32, %c0_i32_0 : i32, i32
  }
  func.func @transform_2(%arg0: i32) -> (i32, i32) {
    %c0_i32 = arith.constant 0 : i32
    %c0_i32_0 = arith.constant 0 : i32
    %c0_i32_1 = arith.constant 0 : i32
    return %c0_i32, %c0_i32_0 : i32, i32
  }
  func.func @transform_3(%arg0: i32) -> (i32, i32) {
    %c0_i32 = arith.constant 0 : i32
    %c0_i32_0 = arith.constant 0 : i32
    return %arg0, %c0_i32 : i32, i32
  }
}

</mosaic_0001>

<llo_original>
// kernel: tpu_custom_call.1
$region0: #{tpu_custom_call.1}
  #allocation0 [shape = 'u32[]', space=smem, size = 0x4, offset = 0x4, fixed_abs, tag = 'smem constant byte address 0x4 - core index']
  #allocation1 [shape = 'u32[72,128]{1,0:T(1,128)}', space=vmem, size = 0x9000, scoped, tag = 'internal scratch']
  %s0 = inlined_call_operand.hbm [shape: f32[16,32], index: 0, kind: input, shape index: {}]
  %s1 = inlined_call_operand.hbm [shape: f32[32,128], index: 1, kind: input, shape index: {}]
  %s2 = inlined_call_operand.vmem [shape: f32[1,128], index: 2, kind: input, shape index: {}]
  %s3 = inlined_call_operand.hbm [shape: f32[16,128], index: 3, kind: output, shape index: {}]
  %s4 = sld [smem:[#allocation0]]
  $region30: #{tpu_custom_call.1} parent=0
    _
  %s6 = ssub.s32 1, %s4
  %s7 = scalar_select 0, %s6, %s4
  $region1: #{tpu_custom_call.1} parent=0
    #allocation2 [shape = 'u8[8192]{0}', space=vmem, size = 0x2000, scoped, tag = 'input window, operand 0, single buffered']
    #allocation3 [shape = 's32[1]{0}', space=sflag, size = 0x4, scoped, tag = 'scoped memory for tpu_custom_call.1']
    #allocation4 [shape = 's32[1]{0}', space=sflag, size = 0x4, scoped, tag = 'scoped memory for tpu_custom_call.1']
    #allocation5 [shape = 'u8[16384]{0}', space=vmem, size = 0x4000, scoped, tag = 'input window, operand 1, single buffered']
    #allocation6 [shape = 's32[1]{0}', space=sflag, size = 0x4, scoped, tag = 'scoped memory for tpu_custom_call.1']
    #allocation7 [shape = 'u8[8192]{0}', space=vmem, size = 0x2000, scoped, tag = 'output window, operand 0, single buffered']
    %8 = vsyncpa [#allocation3], 0
    %9 = vsyncpa [#allocation6], 0
    %10 = vsyncpa [#allocation4], 0
    // Predicated region
    $region2: #{tpu_custom_call.1} parent=1 // pred_check
      _
    $region3: #{tpu_custom_call.1} parent=1 // pred_check_branch
      %12 = sbr.rel (0) target = $region5
    $region4: #{tpu_custom_call.1} parent=1 // pred_region
      %14 = vsyncadd [#allocation3], 0
      %s15 = sshll.u32 %s0, 4
      %s16 = int_to_ptr.hbm [resolvable:$true] %s15
      %s17 = sshll.u32 [#allocation2], 4
      %s18 = int_to_ptr.vmem [resolvable:$true] %s17
      %23 = dma.hbm_to_vmem [thread:$0]  %s16, 256, %s18, [#allocation3], 128, 128, 8
    $region5: #{tpu_custom_call.1} parent=1 // pred_fallthru
      _
    // Predicated region
    $region6: #{tpu_custom_call.1} parent=1 // pred_check
      _
    $region7: #{tpu_custom_call.1} parent=1 // pred_check_branch
      %25 = sbr.rel (0) target = $region9
    $region8: #{tpu_custom_call.1} parent=1 // pred_region
      %27 = vsyncadd [#allocation6], 0
      %s28 = sshll.u32 %s1, 4
      %s29 = int_to_ptr.hbm [resolvable:$true] %s28
      %s30 = sshll.u32 [#allocation5], 4
      %s31 = int_to_ptr.vmem [resolvable:$true] %s30
      %36 = dma.hbm_to_vmem [thread:$0]  %s29, 512, %s31, [#allocation6], 128, 128, 8
    $region9: #{tpu_custom_call.1} parent=1 // pred_fallthru
      _
    // Predicated region
    $region10: #{tpu_custom_call.1} parent=1 // pred_check
      _
    $region11: #{tpu_custom_call.1} parent=1 // pred_check_branch
      %38 = sbr.rel (0) target = $region13
    $region12: #{tpu_custom_call.1} parent=1 // pred_region
      _
    $region13: #{tpu_custom_call.1} parent=1 // pred_fallthru
      _
    // Predicated region
    $region14: #{tpu_custom_call.1} parent=1 // pred_check
      _
    $region15: #{tpu_custom_call.1} parent=1 // pred_check_branch
      %40 = sbr.rel (0) target = $region17
    $region16: #{tpu_custom_call.1} parent=1 // pred_region
      %42 = dma.done [#allocation3], 256
    $region17: #{tpu_custom_call.1} parent=1 // pred_fallthru
      _
    // Predicated region
    $region18: #{tpu_custom_call.1} parent=1 // pred_check
      _
    $region19: #{tpu_custom_call.1} parent=1 // pred_check_branch
      %44 = sbr.rel (0) target = $region21
    $region20: #{tpu_custom_call.1} parent=1 // pred_region
      %46 = dma.done [#allocation6], 512
    $region21: #{tpu_custom_call.1} parent=1 // pred_fallthru
      _
    %v47 = vld [vmem:[#allocation2] sm:$0xff]
    %v48 = vld [vmem:[#allocation2 + $0x8] sm:$0xff]
    %v49 = vld [vmem:[#allocation5] sm:$0xff]
    %v50 = vld [vmem:[#allocation5 + $0x8] sm:$0xff]
    %v51 = vld [vmem:[#allocation5 + $0x10] sm:$0xff]
    %v52 = vld [vmem:[#allocation5 + $0x18] sm:$0xff]
    %v53 = vld [vmem:[%s2] sm:$0x1]
    %v55 = vperm.slane %v53, 0
    %vm57 = vcmask 261120
    %v59 = vsel %vm57, %v47, 0
    %v62 = vsel %vm57, %v48, 0
    %64 = vmatpush.msra.mxu0 0.0
    %65 = vmatpush.msra.mxu0 0.0
    %66 = vmatpush.msra.mxu0 0.0
    %67 = vmatpush.msra.mxu0 0.0
    %68 = vmatpush.msra.mxu0 0.0
    %69 = vmatpush.msra.mxu0 0.0
    %70 = vmatpush.msra.mxu0 0.0
    %71 = vmatpush.msra.mxu0 0.0
    %72 = vmatpush.msra.mxu0 0.0
    %73 = vmatpush.msra.mxu0 0.0
    %74 = vmatpush.msra.mxu0 0.0
    %75 = vmatpush.msra.mxu0 0.0
    %76 = vmatpush.msra.mxu0 %v52
    %77 = vmatpush.msra.mxu0 %v51
    %78 = vmatpush.msra.mxu0 %v50
    %79 = vmatpush.msra.mxu0 %v49
    %80 = vmatmul.f32.gmra.mxu0 %v59
    %v81 = vpop.f32.mrf.mxu0
    %v82 = vadd.f32 %v55, %v81
    %83 = vmatmul.f32.gmra.mxu0 %v62
    %v84 = vpop.f32.mrf.mxu0
    %v85 = vadd.f32 %v55, %v84
    %86 = vdwg.mxu0
    %87 = vmax.xlane.f32.xlu0 %v82
    %v88 = vpop.xlane.xlu0 %87
    %89 = vmax.xlane.f32.xlu0 %v85
    %v90 = vpop.xlane.xlu0 %89
    %v91 = vsub.f32 %v82, %v88
    %v92 = vsub.f32 %v85, %v90
    %v93 = vmul.f32 %v91, 1.442695
    %v94 = vpow.pop %v93
    %v95 = vmul.f32 %v92, 1.442695
    %v96 = vpow.pop %v95
    %97 = vadd.xlane.f32.xlu0 %v94
    %v98 = vpop.xlane.xlu0 %97
    %99 = vadd.xlane.f32.xlu0 %v96
    %v100 = vpop.xlane.xlu0 %99
    %v101 = vlog2.pop %v98
    %v102 = vmul.f32 %v101, 0.6931472
    %v103 = vlog2.pop %v100
    %v104 = vmul.f32 %v103, 0.6931472
    %v105 = vsub.f32 %v91, %v102
    %v106 = vsub.f32 %v92, %v104
    %107 = vst [vmem:[#allocation7] sm:$0xff] %v105
    %108 = vst [vmem:[#allocation7 + $0x8] sm:$0xff] %v106
    // Predicated region
    $region22: #{tpu_custom_call.1} parent=1 // pred_check
      _
    $region23: #{tpu_custom_call.1} parent=1 // pred_check_branch
      %110 = sbr.rel (0) target = $region25
    $region24: #{tpu_custom_call.1} parent=1 // pred_region
      %112 = vsyncadd [#allocation4], 0
      %s113 = sshll.u32 [#allocation7], 4
      %s114 = int_to_ptr.vmem [resolvable:$true] %s113
      %s115 = sshll.u32 %s3, 4
      %s116 = int_to_ptr.hbm [resolvable:$true] %s115
      %121 = dma.vmem_to_hbm [thread:$0]  %s114, 256, %s116, [#allocation4], 128, 128, 8
    $region25: #{tpu_custom_call.1} parent=1 // pred_fallthru
      _
    // Predicated region
    $region26: #{tpu_custom_call.1} parent=1 // pred_check
      _
    $region27: #{tpu_custom_call.1} parent=1 // pred_check_branch
      %123 = sbr.rel (0) target = $region29
    $region28: #{tpu_custom_call.1} parent=1 // pred_region
      %125 = dma.done [#allocation4], 256
    $region29: #{tpu_custom_call.1} parent=1 // pred_fallthru
      _
    %126 = vsyncpa [#allocation3], 1
    %127 = vsyncpa [#allocation6], 1
    %128 = vsyncpa [#allocation4], 1

</llo_original>
